<compile_context>
chip_gen: v7x
topology: tpu7x:2x2x1
jax: 0.10.0
libtpu: 0.0.40
codegen_flags: <defaults>
</compile_context>

<pallas_src>
import jax
import jax.numpy as jnp
from jax.experimental import pallas as pl
from jax.experimental.pallas import tpu as pltpu

# ---- model / test dimensions (small, consistent with the module) ----------
H       = 32                  # hidden_dim
X_DIM   = 64                  # x_dim
PRO_DIM = 48                  # pro_dim
B       = 16                  # batch
IN_DIM  = X_DIM + PRO_DIM     # concatenated [x | pro] feature width
H4      = H // 4
H16     = H // 16
BN_EPS  = 1e-5
LN_EPS  = 1e-5
SLAB_W  = 128                 # lane width of the packed-parameter slab
assert 2 * H <= SLAB_W


def _erf(x):
    # Abramowitz & Stegun 7.1.26 rational approximation (max abs err ~1.5e-7).
    a1, a2, a3, a4, a5 = 0.254829592, -0.284496736, 1.421413741, -1.453152027, 1.061405429
    p = 0.3275911
    sign = jnp.where(x >= 0.0, 1.0, -1.0)
    ax = jnp.abs(x)
    t = 1.0 / (1.0 + p * ax)
    poly = ((((a5 * t + a4) * t + a3) * t + a2) * t + a1) * t
    return sign * (1.0 - poly * jnp.exp(-ax * ax))


def _gelu_exact(x):
    # matches torch.nn.GELU() (erf formulation); kept in f32 (v5e has no bf16 VPU/EUP)
    return 0.5 * x * (1.0 + _erf(x * 0.7071067811865476))


# ---------------------------------------------------------------------------
# Pallas kernel: the whole eval-mode forward for one batch tile.
# inputs:
#   xp_ref   : (TB, IN_DIM)       concatenated [x | pro]
#   w_in_ref : (IN_DIM, 2H)       block-diagonal fused (Linear∘BN) weights
#   m_ref    : (2H, H)            [[I_H], [wv @ wo]]  (identity pass-through of
#                                 x_feat stacked on the composed attention proj)
#   w1_ref   : (H, H4), w2_ref : (H4, H16)   regressor linears
#   slab_ref : (8, 128)           packed small params, one per row:
#                                 0:b_in(2H) 1:bvo(H) 2:ln_gamma(H) 3:ln_beta(H)
#                                 4:b1(H4)   5:b2(H16) 6:w3(H16)    7:b3(1)
# output:
#   out_ref  : (TB, 1)
# ---------------------------------------------------------------------------
def cross_attn_regressor_kernel(xp_ref, w_in_ref, m_ref, w1_ref, w2_ref,
                                slab_ref, out_ref):
    f32 = jnp.float32
    xp = xp_ref[...]

    b_in = slab_ref[0:1, 0:2 * H]
    bvo  = slab_ref[1:2, 0:H]
    lng  = slab_ref[2:3, 0:H]
    lnb  = slab_ref[3:4, 0:H]
    b1   = slab_ref[4:5, 0:H4]
    b2   = slab_ref[5:6, 0:H16]
    w3   = slab_ref[6:7, 0:H16]
    b3   = slab_ref[7:8, 0:1]

    # ---- fused x_mlp / pro_mlp: one block-diagonal matmul, BN already folded,
    #      dropout is eval-mode identity.
    h = jnp.dot(xp, w_in_ref[...], preferred_element_type=f32) + b_in    # (TB, 2H)
    h = jnp.maximum(h, 0.0)                                              # ReLU

    # ---- x_feat + MultiheadAttention(query=x_feat, key=value=pro_feat):
    # with seq_len 1 the per-head softmax over the single key is exactly 1, so
    # attn_out == out_proj(v_proj(pro_feat)); Q/K projections cannot affect the
    # output. wv@wo is pre-composed and stacked under I_H, so one matmul yields
    # x_feat + attn_out directly. (attention dropout is eval-mode identity)
    fused = jnp.dot(h, m_ref[...], preferred_element_type=f32) + bvo     # (TB, H)

    # ---- regressor: LayerNorm -> Linear -> GELU -> Linear -> GELU -> Linear(->1)
    mu = jnp.mean(fused, axis=-1, keepdims=True)
    var = jnp.mean((fused - mu) ** 2, axis=-1, keepdims=True)
    g = (fused - mu) * jax.lax.rsqrt(var + LN_EPS)
    g = g * lng + lnb

    g = _gelu_exact(jnp.dot(g, w1_ref[...], preferred_element_type=f32) + b1)
    g = _gelu_exact(jnp.dot(g, w2_ref[...], preferred_element_type=f32) + b2)
    # final Linear(H16 -> 1) as a lane reduction (avoids a tiny N=1 matmul)
    out_ref[...] = jnp.sum(g * w3, axis=-1, keepdims=True) + b3


# ---------------------------------------------------------------------------
# wrapper-side constant folding (all valid in eval mode only)
# ---------------------------------------------------------------------------
def fold_params(p):
    f32 = jnp.float32
    # BatchNorm1d (eval, running stats) folded into the preceding Linear.
    wx_f = p["wx"] * p["sx"]
    bx_f = p["bx"] * p["sx"] + p["shx"]
    wp_f = p["wp"] * p["sp"]
    bp_f = p["bp"] * p["sp"] + p["shp"]

    # block-diagonal fused input projection over [x | pro]
    w_in = jnp.zeros((IN_DIM, 2 * H), f32)
    w_in = w_in.at[:X_DIM, :H].set(wx_f)
    w_in = w_in.at[X_DIM:, H:].set(wp_f)
    b_in = jnp.concatenate([bx_f, bp_f], axis=1)                  # (1, 2H)

    # compose attention V-proj and out-proj; stack identity so one matmul
    # produces x_feat + attn_out.
    wvo = p["wv"] @ p["wo"]                                       # (H, H)
    bvo = p["bv"] @ p["wo"] + p["bo"]                             # (1, H)
    m = jnp.concatenate([jnp.eye(H, dtype=f32), wvo], axis=0)     # (2H, H)

    # pack every remaining small (1, *) parameter into one (8, 128) slab.
    def _row(v):
        v = jnp.asarray(v, f32).reshape(1, -1)
        return jnp.pad(v, ((0, 0), (0, SLAB_W - v.shape[1])))

    slab = jnp.concatenate(
        [_row(b_in), _row(bvo), _row(p["lng"]), _row(p["lnb"]),
         _row(p["b1"]), _row(p["b2"]), _row(p["w3"]), _row(p["b3"])], axis=0)

    return dict(w_in=w_in, m=m, w1=p["w1"], w2=p["w2"], slab=slab)


def cross_attention_regressor(x, pro, folded):
    bsz = x.shape[0]
    # one grid step at small batch; 256-row tiles once batch grows (amortizes
    # per-step overhead, lets v7x's second core pick up parallel slices).
    tb = bsz if bsz <= 256 else 256
    assert bsz % tb == 0, "batch must be a multiple of 256 when larger than 256"

    xp = jnp.concatenate([x, pro], axis=1)                        # (bsz, IN_DIM)

    in_specs = [
        pl.BlockSpec((tb, IN_DIM), lambda i: (i, 0)),
        pl.BlockSpec((IN_DIM, 2 * H), lambda i: (0, 0)),
        pl.BlockSpec((2 * H, H), lambda i: (0, 0)),
        pl.BlockSpec((H, H4), lambda i: (0, 0)),
        pl.BlockSpec((H4, H16), lambda i: (0, 0)),
        pl.BlockSpec((8, SLAB_W), lambda i: (0, 0)),
    ]
    out = pl.pallas_call(
        cross_attn_regressor_kernel,
        out_shape=jax.ShapeDtypeStruct((bsz, 1), jnp.float32),
        grid=(bsz // tb,),
        in_specs=in_specs,
        out_specs=pl.BlockSpec((tb, 1), lambda i: (i, 0)),
        compiler_params=pltpu.CompilerParams(dimension_semantics=("parallel",)),
    )(xp, folded["w_in"], folded["m"], folded["w1"], folded["w2"], folded["slab"])
    return out[:, 0]


# ---------------------------------------------------------------------------
# parameter construction (matches the module's init; BN in eval mode with
# default running stats) and a pure-JAX reference for validation.
# ---------------------------------------------------------------------------
def init_params(key):
    ks = jax.random.split(key, 8)

    def kaiming(k, fin, fout):
        # torch kaiming_normal_(nonlinearity='relu'), stored transposed (in, out)
        return jax.random.normal(k, (fin, fout), jnp.float32) * jnp.sqrt(2.0 / fin)

    def xavier_u(k, fin, fout):
        lim = jnp.sqrt(6.0 / (fin + fout))
        return jax.random.uniform(k, (fin, fout), jnp.float32, -lim, lim)

    # BatchNorm1d eval mode with default stats: gamma=1, beta=0, mean=0, var=1
    bn_scale = jnp.full((1, H), 1.0 / jnp.sqrt(1.0 + BN_EPS), jnp.float32)
    bn_shift = jnp.zeros((1, H), jnp.float32)

    return dict(
        wx=kaiming(ks[0], X_DIM, H),   bx=jnp.full((1, H), 0.1, jnp.float32),
        sx=bn_scale,                   shx=bn_shift,
        wp=kaiming(ks[1], PRO_DIM, H), bp=jnp.full((1, H), 0.1, jnp.float32),
        sp=bn_scale,                   shp=bn_shift,
        wv=xavier_u(ks[2], H, H),      bv=jnp.zeros((1, H), jnp.float32),
        wo=xavier_u(ks[3], H, H),      bo=jnp.zeros((1, H), jnp.float32),
        lng=jnp.ones((1, H), jnp.float32), lnb=jnp.zeros((1, H), jnp.float32),
        w1=kaiming(ks[4], H, H4),      b1=jnp.full((1, H4), 0.1, jnp.float32),
        w2=kaiming(ks[5], H4, H16),    b2=jnp.full((1, H16), 0.1, jnp.float32),
        w3=kaiming(ks[6], H16, 1).reshape(1, H16),
        b3=jnp.full((1, 1), 0.1, jnp.float32),
    )


def forward_ref(x, pro, p):
    """Pure-JAX reference (eval mode), using the UNfolded parameters."""
    xf = jax.nn.relu((x @ p["wx"] + p["bx"]) * p["sx"] + p["shx"])
    pf = jax.nn.relu((pro @ p["wp"] + p["bp"]) * p["sp"] + p["shp"])
    v = pf @ p["wv"] + p["bv"]
    attn = v @ p["wo"] + p["bo"]
    fused = xf + attn
    mu = fused.mean(-1, keepdims=True)
    var = ((fused - mu) ** 2).mean(-1, keepdims=True)
    h = (fused - mu) / jnp.sqrt(var + LN_EPS) * p["lng"] + p["lnb"]
    h = jax.nn.gelu(h @ p["w1"] + p["b1"], approximate=False)
    h = jax.nn.gelu(h @ p["w2"] + p["b2"], approximate=False)
    out = jnp.sum(h * p["w3"], axis=-1) + p["b3"][0, 0]
    return out


if __name__ == "__main__":
    key = jax.random.PRNGKey(0)
    kx, kp, kparam = jax.random.split(key, 3)
    x_embed = jax.random.normal(kx, (B, X_DIM), jnp.float32)
    pro_embed = jax.random.normal(kp, (B, PRO_DIM), jnp.float32)
    params = init_params(kparam)
    folded = fold_params(params)

    out = cross_attention_regressor(x_embed, pro_embed, folded)
    out = jax.block_until_ready(out)

    ref = forward_ref(x_embed, pro_embed, params)
    assert out.shape == (B,)
    assert jnp.allclose(out, ref, rtol=1e-3, atol=1e-3), (out, ref)
    print("KERNEL_OK")
</pallas_src>

<mosaic_0001>
module attributes {stable_mosaic.version = 11 : i64} {
  func.func @cross_attn_regressor_kernel(%arg0: i32, %arg1: memref<16x112xf32, #tpu.memory_space<vmem>>, %arg2: memref<112x64xf32, #tpu.memory_space<vmem>>, %arg3: memref<64x32xf32, #tpu.memory_space<vmem>>, %arg4: memref<32x8xf32, #tpu.memory_space<vmem>>, %arg5: memref<8x2xf32, #tpu.memory_space<vmem>>, %arg6: memref<8x128xf32, #tpu.memory_space<vmem>>, %arg7: memref<16x1xf32, #tpu.memory_space<vmem>>) attributes {dimension_semantics = [#tpu.dimension_semantics<parallel>], iteration_bounds = array<i64: 1>, scalar_prefetch = 0 : i64, scratch_operands = 0 : i64, tpu.core_type = #tpu.core_type<tc>, window_params = [{transform_indices = @transform_0, window_bounds = array<i64: 16, 112>}, {pipeline_mode = #tpu.pipeline_mode<synchronous>, transform_indices = @transform_1, window_bounds = array<i64: 112, 64>}, {pipeline_mode = #tpu.pipeline_mode<synchronous>, transform_indices = @transform_2, window_bounds = array<i64: 64, 32>}, {pipeline_mode = #tpu.pipeline_mode<synchronous>, transform_indices = @transform_3, window_bounds = array<i64: 32, 8>}, {pipeline_mode = #tpu.pipeline_mode<synchronous>, transform_indices = @transform_4, window_bounds = array<i64: 8, 2>}, {pipeline_mode = #tpu.pipeline_mode<synchronous>, transform_indices = @transform_5, window_bounds = array<i64: 8, 128>}, {transform_indices = @transform_6, window_bounds = array<i64: 16, 1>}]} {
    %c0 = arith.constant 0 : index
    %c0_0 = arith.constant 0 : index
    %0 = vector.load %arg1[%c0, %c0_0] : memref<16x112xf32, #tpu.memory_space<vmem>>, vector<16x112xf32>
    %c0_1 = arith.constant 0 : index
    %c0_2 = arith.constant 0 : index
    %1 = vector.load %arg6[%c0_1, %c0_2] : memref<8x128xf32, #tpu.memory_space<vmem>>, vector<1x64xf32>
    %c1 = arith.constant 1 : index
    %c0_3 = arith.constant 0 : index
    %2 = vector.load %arg6[%c1, %c0_3] : memref<8x128xf32, #tpu.memory_space<vmem>>, vector<1x32xf32>
    %c2 = arith.constant 2 : index
    %c0_4 = arith.constant 0 : index
    %3 = vector.load %arg6[%c2, %c0_4] : memref<8x128xf32, #tpu.memory_space<vmem>>, vector<1x32xf32>
    %c3 = arith.constant 3 : index
    %c0_5 = arith.constant 0 : index
    %4 = vector.load %arg6[%c3, %c0_5] : memref<8x128xf32, #tpu.memory_space<vmem>>, vector<1x32xf32>
    %c4 = arith.constant 4 : index
    %c0_6 = arith.constant 0 : index
    %5 = vector.load %arg6[%c4, %c0_6] : memref<8x128xf32, #tpu.memory_space<vmem>>, vector<1x8xf32>
    %c5 = arith.constant 5 : index
    %c0_7 = arith.constant 0 : index
    %6 = vector.load %arg6[%c5, %c0_7] : memref<8x128xf32, #tpu.memory_space<vmem>>, vector<1x2xf32>
    %c6 = arith.constant 6 : index
    %c0_8 = arith.constant 0 : index
    %7 = vector.load %arg6[%c6, %c0_8] : memref<8x128xf32, #tpu.memory_space<vmem>>, vector<1x2xf32>
    %c7 = arith.constant 7 : index
    %c0_9 = arith.constant 0 : index
    %8 = vector.load %arg6[%c7, %c0_9] : memref<8x128xf32, #tpu.memory_space<vmem>>, vector<1x1xf32>
    %c0_10 = arith.constant 0 : index
    %c0_11 = arith.constant 0 : index
    %9 = vector.load %arg2[%c0_10, %c0_11] : memref<112x64xf32, #tpu.memory_space<vmem>>, vector<112x64xf32>
    %cst = arith.constant dense<0.000000e+00> : vector<16x64xf32>
    %10 = tpu.matmul %0, %9, %cst {dimension_numbers = #tpu.dot_dimension_numbers<[1], [0], [0], [1], [0, 0, 1, 1], [], []>} : vector<16x112xf32>, vector<112x64xf32>, vector<16x64xf32> -> vector<16x64xf32>
    %11 = vector.broadcast %1 : vector<1x64xf32> to vector<16x64xf32>
    %12 = arith.addf %10, %11 : vector<16x64xf32>
    %cst_12 = arith.constant 0.000000e+00 : f32
    %13 = vector.broadcast %cst_12 : f32 to vector<16x64xf32>
    %14 = arith.maximumf %12, %13 : vector<16x64xf32>
    %c0_13 = arith.constant 0 : index
    %c0_14 = arith.constant 0 : index
    %15 = vector.load %arg3[%c0_13, %c0_14] : memref<64x32xf32, #tpu.memory_space<vmem>>, vector<64x32xf32>
    %cst_15 = arith.constant dense<0.000000e+00> : vector<16x32xf32>
    %16 = tpu.matmul %14, %15, %cst_15 {dimension_numbers = #tpu.dot_dimension_numbers<[1], [0], [0], [1], [0, 0, 1, 1], [], []>} : vector<16x64xf32>, vector<64x32xf32>, vector<16x32xf32> -> vector<16x32xf32>
    %17 = vector.broadcast %2 : vector<1x32xf32> to vector<16x32xf32>
    %18 = arith.addf %16, %17 : vector<16x32xf32>
    %cst_16 = arith.constant dense<0.000000e+00> : vector<16xf32>
    %19 = vector.multi_reduction <add>, %18, %cst_16 [1] : vector<16x32xf32> to vector<16xf32>
    %20 = vector.shape_cast %19 : vector<16xf32> to vector<16x1xf32>
    %cst_17 = arith.constant 3.200000e+01 : f32
    %21 = vector.broadcast %cst_17 : f32 to vector<16x1xf32>
    %22 = arith.divf %20, %21 : vector<16x1xf32>
    %23 = vector.broadcast %22 : vector<16x1xf32> to vector<16x32xf32>
    %24 = arith.subf %18, %23 : vector<16x32xf32>
    %25 = arith.mulf %24, %24 : vector<16x32xf32>
    %cst_18 = arith.constant dense<0.000000e+00> : vector<16xf32>
    %26 = vector.multi_reduction <add>, %25, %cst_18 [1] : vector<16x32xf32> to vector<16xf32>
    %27 = vector.shape_cast %26 : vector<16xf32> to vector<16x1xf32>
    %cst_19 = arith.constant 3.200000e+01 : f32
    %28 = vector.broadcast %cst_19 : f32 to vector<16x1xf32>
    %29 = arith.divf %27, %28 : vector<16x1xf32>
    %30 = vector.broadcast %22 : vector<16x1xf32> to vector<16x32xf32>
    %31 = arith.subf %18, %30 : vector<16x32xf32>
    %cst_20 = arith.constant 9.99999974E-6 : f32
    %32 = vector.broadcast %cst_20 : f32 to vector<16x1xf32>
    %33 = arith.addf %29, %32 : vector<16x1xf32>
    %34 = math.rsqrt %33 : vector<16x1xf32>
    %35 = vector.broadcast %34 : vector<16x1xf32> to vector<16x32xf32>
    %36 = arith.mulf %31, %35 : vector<16x32xf32>
    %37 = vector.broadcast %3 : vector<1x32xf32> to vector<16x32xf32>
    %38 = arith.mulf %36, %37 : vector<16x32xf32>
    %39 = vector.broadcast %4 : vector<1x32xf32> to vector<16x32xf32>
    %40 = arith.addf %38, %39 : vector<16x32xf32>
    %c0_21 = arith.constant 0 : index
    %c0_22 = arith.constant 0 : index
    %41 = vector.load %arg4[%c0_21, %c0_22] : memref<32x8xf32, #tpu.memory_space<vmem>>, vector<32x8xf32>
    %cst_23 = arith.constant dense<0.000000e+00> : vector<16x8xf32>
    %42 = tpu.matmul %40, %41, %cst_23 {dimension_numbers = #tpu.dot_dimension_numbers<[1], [0], [0], [1], [0, 0, 1, 1], [], []>} : vector<16x32xf32>, vector<32x8xf32>, vector<16x8xf32> -> vector<16x8xf32>
    %43 = vector.broadcast %5 : vector<1x8xf32> to vector<16x8xf32>
    %44 = arith.addf %42, %43 : vector<16x8xf32>
    %cst_24 = arith.constant 5.000000e-01 : f32
    %45 = vector.broadcast %cst_24 : f32 to vector<16x8xf32>
    %46 = arith.mulf %45, %44 : vector<16x8xf32>
    %cst_25 = arith.constant 0.707106769 : f32
    %47 = vector.broadcast %cst_25 : f32 to vector<16x8xf32>
    %48 = arith.mulf %44, %47 : vector<16x8xf32>
    %cst_26 = arith.constant 0.000000e+00 : f32
    %49 = vector.broadcast %cst_26 : f32 to vector<16x8xf32>
    %50 = arith.cmpf oge, %48, %49 : vector<16x8xf32>
    %cst_27 = arith.constant 1.000000e+00 : f32
    %cst_28 = arith.constant -1.000000e+00 : f32
    %51 = vector.broadcast %cst_27 : f32 to vector<16x8xf32>
    %52 = vector.broadcast %cst_28 : f32 to vector<16x8xf32>
    %53 = arith.select %50, %51, %52 : vector<16x8xi1>, vector<16x8xf32>
    %54 = math.absf %48 : vector<16x8xf32>
    %cst_29 = arith.constant 0.327591091 : f32
    %55 = vector.broadcast %cst_29 : f32 to vector<16x8xf32>
    %56 = arith.mulf %55, %54 : vector<16x8xf32>
    %cst_30 = arith.constant 1.000000e+00 : f32
    %57 = vector.broadcast %cst_30 : f32 to vector<16x8xf32>
    %58 = arith.addf %57, %56 : vector<16x8xf32>
    %cst_31 = arith.constant 1.000000e+00 : f32
    %59 = vector.broadcast %cst_31 : f32 to vector<16x8xf32>
    %60 = arith.divf %59, %58 : vector<16x8xf32>
    %cst_32 = arith.constant 1.06140542 : f32
    %61 = vector.broadcast %cst_32 : f32 to vector<16x8xf32>
    %62 = arith.mulf %61, %60 : vector<16x8xf32>
    %cst_33 = arith.constant -1.45315206 : f32
    %63 = vector.broadcast %cst_33 : f32 to vector<16x8xf32>
    %64 = arith.addf %62, %63 : vector<16x8xf32>
    %65 = arith.mulf %64, %60 : vector<16x8xf32>
    %cst_34 = arith.constant 1.42141378 : f32
    %66 = vector.broadcast %cst_34 : f32 to vector<16x8xf32>
    %67 = arith.addf %65, %66 : vector<16x8xf32>
    %68 = arith.mulf %67, %60 : vector<16x8xf32>
    %cst_35 = arith.constant -0.284496725 : f32
    %69 = vector.broadcast %cst_35 : f32 to vector<16x8xf32>
    %70 = arith.addf %68, %69 : vector<16x8xf32>
    %71 = arith.mulf %70, %60 : vector<16x8xf32>
    %cst_36 = arith.constant 0.254829586 : f32
    %72 = vector.broadcast %cst_36 : f32 to vector<16x8xf32>
    %73 = arith.addf %71, %72 : vector<16x8xf32>
    %74 = arith.mulf %73, %60 : vector<16x8xf32>
    %cst_37 = arith.constant 0.000000e+00 : f32
    %75 = vector.broadcast %cst_37 : f32 to vector<16x8xf32>
    %76 = arith.subf %75, %54 : vector<16x8xf32>
    %77 = arith.mulf %76, %54 : vector<16x8xf32>
    %78 = math.exp %77 : vector<16x8xf32>
    %79 = arith.mulf %74, %78 : vector<16x8xf32>
    %cst_38 = arith.constant 1.000000e+00 : f32
    %80 = vector.broadcast %cst_38 : f32 to vector<16x8xf32>
    %81 = arith.subf %80, %79 : vector<16x8xf32>
    %82 = arith.mulf %53, %81 : vector<16x8xf32>
    %cst_39 = arith.constant 1.000000e+00 : f32
    %83 = vector.broadcast %cst_39 : f32 to vector<16x8xf32>
    %84 = arith.addf %83, %82 : vector<16x8xf32>
    %85 = arith.mulf %46, %84 : vector<16x8xf32>
    %c0_40 = arith.constant 0 : index
    %c0_41 = arith.constant 0 : index
    %86 = vector.load %arg5[%c0_40, %c0_41] : memref<8x2xf32, #tpu.memory_space<vmem>>, vector<8x2xf32>
    %cst_42 = arith.constant dense<0.000000e+00> : vector<16x2xf32>
    %87 = tpu.matmul %85, %86, %cst_42 {dimension_numbers = #tpu.dot_dimension_numbers<[1], [0], [0], [1], [0, 0, 1, 1], [], []>} : vector<16x8xf32>, vector<8x2xf32>, vector<16x2xf32> -> vector<16x2xf32>
    %88 = vector.broadcast %6 : vector<1x2xf32> to vector<16x2xf32>
    %89 = arith.addf %87, %88 : vector<16x2xf32>
    %cst_43 = arith.constant 5.000000e-01 : f32
    %90 = vector.broadcast %cst_43 : f32 to vector<16x2xf32>
    %91 = arith.mulf %90, %89 : vector<16x2xf32>
    %cst_44 = arith.constant 0.707106769 : f32
    %92 = vector.broadcast %cst_44 : f32 to vector<16x2xf32>
    %93 = arith.mulf %89, %92 : vector<16x2xf32>
    %cst_45 = arith.constant 0.000000e+00 : f32
    %94 = vector.broadcast %cst_45 : f32 to vector<16x2xf32>
    %95 = arith.cmpf oge, %93, %94 : vector<16x2xf32>
    %cst_46 = arith.constant 1.000000e+00 : f32
    %cst_47 = arith.constant -1.000000e+00 : f32
    %96 = vector.broadcast %cst_46 : f32 to vector<16x2xf32>
    %97 = vector.broadcast %cst_47 : f32 to vector<16x2xf32>
    %98 = arith.select %95, %96, %97 : vector<16x2xi1>, vector<16x2xf32>
    %99 = math.absf %93 : vector<16x2xf32>
    %cst_48 = arith.constant 0.327591091 : f32
    %100 = vector.broadcast %cst_48 : f32 to vector<16x2xf32>
    %101 = arith.mulf %100, %99 : vector<16x2xf32>
    %cst_49 = arith.constant 1.000000e+00 : f32
    %102 = vector.broadcast %cst_49 : f32 to vector<16x2xf32>
    %103 = arith.addf %102, %101 : vector<16x2xf32>
    %cst_50 = arith.constant 1.000000e+00 : f32
    %104 = vector.broadcast %cst_50 : f32 to vector<16x2xf32>
    %105 = arith.divf %104, %103 : vector<16x2xf32>
    %cst_51 = arith.constant 1.06140542 : f32
    %106 = vector.broadcast %cst_51 : f32 to vector<16x2xf32>
    %107 = arith.mulf %106, %105 : vector<16x2xf32>
    %cst_52 = arith.constant -1.45315206 : f32
    %108 = vector.broadcast %cst_52 : f32 to vector<16x2xf32>
    %109 = arith.addf %107, %108 : vector<16x2xf32>
    %110 = arith.mulf %109, %105 : vector<16x2xf32>
    %cst_53 = arith.constant 1.42141378 : f32
    %111 = vector.broadcast %cst_53 : f32 to vector<16x2xf32>
    %112 = arith.addf %110, %111 : vector<16x2xf32>
    %113 = arith.mulf %112, %105 : vector<16x2xf32>
    %cst_54 = arith.constant -0.284496725 : f32
    %114 = vector.broadcast %cst_54 : f32 to vector<16x2xf32>
    %115 = arith.addf %113, %114 : vector<16x2xf32>
    %116 = arith.mulf %115, %105 : vector<16x2xf32>
    %cst_55 = arith.constant 0.254829586 : f32
    %117 = vector.broadcast %cst_55 : f32 to vector<16x2xf32>
    %118 = arith.addf %116, %117 : vector<16x2xf32>
    %119 = arith.mulf %118, %105 : vector<16x2xf32>
    %cst_56 = arith.constant 0.000000e+00 : f32
    %120 = vector.broadcast %cst_56 : f32 to vector<16x2xf32>
    %121 = arith.subf %120, %99 : vector<16x2xf32>
    %122 = arith.mulf %121, %99 : vector<16x2xf32>
    %123 = math.exp %122 : vector<16x2xf32>
    %124 = arith.mulf %119, %123 : vector<16x2xf32>
    %cst_57 = arith.constant 1.000000e+00 : f32
    %125 = vector.broadcast %cst_57 : f32 to vector<16x2xf32>
    %126 = arith.subf %125, %124 : vector<16x2xf32>
    %127 = arith.mulf %98, %126 : vector<16x2xf32>
    %cst_58 = arith.constant 1.000000e+00 : f32
    %128 = vector.broadcast %cst_58 : f32 to vector<16x2xf32>
    %129 = arith.addf %128, %127 : vector<16x2xf32>
    %130 = arith.mulf %91, %129 : vector<16x2xf32>
    %131 = vector.broadcast %7 : vector<1x2xf32> to vector<16x2xf32>
    %132 = arith.mulf %130, %131 : vector<16x2xf32>
    %cst_59 = arith.constant dense<0.000000e+00> : vector<16xf32>
    %133 = vector.multi_reduction <add>, %132, %cst_59 [1] : vector<16x2xf32> to vector<16xf32>
    %134 = vector.shape_cast %133 : vector<16xf32> to vector<16x1xf32>
    %135 = vector.broadcast %8 : vector<1x1xf32> to vector<16x1xf32>
    %136 = arith.addf %134, %135 : vector<16x1xf32>
    %c0_60 = arith.constant 0 : index
    %c0_61 = arith.constant 0 : index
    %137 = vector.load %arg7[%c0_60, %c0_61] : memref<16x1xf32, #tpu.memory_space<vmem>>, vector<16x1xf32>
    tpu.vector_store %arg7[%c0_60, %c0_61], %136 {strides = array<i32>} : memref<16x1xf32, #tpu.memory_space<vmem>>, vector<16x1xf32>,
    return
  }
  func.func @transform_0(%arg0: i32) -> (i32, i32) {
    %c0_i32 = arith.constant 0 : i32
    %c0_i32_0 = arith.constant 0 : i32
    return %arg0, %c0_i32 : i32, i32
  }
  func.func @transform_1(%arg0: i32) -> (i32, i32) {
    %c0_i32 = arith.constant 0 : i32
    %c0_i32_0 = arith.constant 0 : i32
    %c0_i32_1 = arith.constant 0 : i32
    return %c0_i32, %c0_i32_0 : i32, i32
  }
  func.func @transform_2(%arg0: i32) -> (i32, i32) {
    %c0_i32 = arith.constant 0 : i32
    %c0_i32_0 = arith.constant 0 : i32
    %c0_i32_1 = arith.constant 0 : i32
    return %c0_i32, %c0_i32_0 : i32, i32
  }
  func.func @transform_3(%arg0: i32) -> (i32, i32) {
    %c0_i32 = arith.constant 0 : i32
    %c0_i32_0 = arith.constant 0 : i32
    %c0_i32_1 = arith.constant 0 : i32
    return %c0_i32, %c0_i32_0 : i32, i32
  }
  func.func @transform_4(%arg0: i32) -> (i32, i32) {
    %c0_i32 = arith.constant 0 : i32
    %c0_i32_0 = arith.constant 0 : i32
    %c0_i32_1 = arith.constant 0 : i32
    return %c0_i32, %c0_i32_0 : i32, i32
  }
  func.func @transform_5(%arg0: i32) -> (i32, i32) {
    %c0_i32 = arith.constant 0 : i32
    %c0_i32_0 = arith.constant 0 : i32
    %c0_i32_1 = arith.constant 0 : i32
    return %c0_i32, %c0_i32_0 : i32, i32
  }
  func.func @transform_6(%arg0: i32) -> (i32, i32) {
    %c0_i32 = arith.constant 0 : i32
    %c0_i32_0 = arith.constant 0 : i32
    return %arg0, %c0_i32 : i32, i32
  }
}

</mosaic_0001>

<llo_original>
// kernel: tpu_custom_call.1
$region0: #{tpu_custom_call.1}
  #allocation0 [shape = 'u32[]', space=smem, size = 0x4, offset = 0x4, fixed_abs, tag = 'smem constant byte address 0x4 - core index']
  #allocation1 [shape = 'u32[144,128]{1,0:T(1,128)}', space=vmem, size = 0x12000, scoped, tag = 'internal scratch']
  %s0 = inlined_call_operand.vmem [shape: f32[16,112], index: 0, kind: input, shape index: {}]
  %s1 = inlined_call_operand.vmem [shape: f32[112,64], index: 1, kind: input, shape index: {}]
  %s2 = inlined_call_operand.vmem [shape: f32[64,32], index: 2, kind: input, shape index: {}]
  %s3 = inlined_call_operand.vmem [shape: f32[32,8], index: 3, kind: input, shape index: {}]
  %s4 = inlined_call_operand.vmem [shape: f32[8,2], index: 4, kind: input, shape index: {}]
  %s5 = inlined_call_operand.vmem [shape: f32[8,128], index: 5, kind: input, shape index: {}]
  %s6 = inlined_call_operand.vmem [shape: f32[16,1], index: 6, kind: output, shape index: {}]
  %s7 = sld [smem:[#allocation0]]
  $region34: #{tpu_custom_call.1} parent=0
    _
  %s9 = ssub.s32 1, %s7
  %s10 = scalar_select 0, %s9, %s7
  // Predicated region
  $region2: #{tpu_custom_call.1} parent=0 // pred_check
    _
  $region3: #{tpu_custom_call.1} parent=0 // pred_check_branch
    %12 = sbr.rel (0) target = $region5
  $region4: #{tpu_custom_call.1} parent=0 // pred_region
    _
  $region5: #{tpu_custom_call.1} parent=0 // pred_fallthru
    _
  // Predicated region
  $region6: #{tpu_custom_call.1} parent=0 // pred_check
    _
  $region7: #{tpu_custom_call.1} parent=0 // pred_check_branch
    %14 = sbr.rel (0) target = $region9
  $region8: #{tpu_custom_call.1} parent=0 // pred_region
    _
  $region9: #{tpu_custom_call.1} parent=0 // pred_fallthru
    _
  // Predicated region
  $region10: #{tpu_custom_call.1} parent=0 // pred_check
    _
  $region11: #{tpu_custom_call.1} parent=0 // pred_check_branch
    %16 = sbr.rel (0) target = $region13
  $region12: #{tpu_custom_call.1} parent=0 // pred_region
    _
  $region13: #{tpu_custom_call.1} parent=0 // pred_fallthru
    _
  // Predicated region
  $region14: #{tpu_custom_call.1} parent=0 // pred_check
    _
  $region15: #{tpu_custom_call.1} parent=0 // pred_check_branch
    %18 = sbr.rel (0) target = $region17
  $region16: #{tpu_custom_call.1} parent=0 // pred_region
    _
  $region17: #{tpu_custom_call.1} parent=0 // pred_fallthru
    _
  // Predicated region
  $region18: #{tpu_custom_call.1} parent=0 // pred_check
    _
  $region19: #{tpu_custom_call.1} parent=0 // pred_check_branch
    %20 = sbr.rel (0) target = $region21
  $region20: #{tpu_custom_call.1} parent=0 // pred_region
    _
  $region21: #{tpu_custom_call.1} parent=0 // pred_fallthru
    _
  // Predicated region
  $region22: #{tpu_custom_call.1} parent=0 // pred_check
    _
  $region23: #{tpu_custom_call.1} parent=0 // pred_check_branch
    %22 = sbr.rel (0) target = $region25
  $region24: #{tpu_custom_call.1} parent=0 // pred_region
    _
  $region25: #{tpu_custom_call.1} parent=0 // pred_fallthru
    _
  %v23 = vld [vmem:[%s0] sm:$0xff]
  %v24 = vld [vmem:[%s0 + $0x8] sm:$0xff]
  %v25 = vld [vmem:[%s5] sm:$0x1]
  %v26 = vld [vmem:[%s5 + $0x1] sm:$0x1]
  %v27 = vld [vmem:[%s5 + $0x2] sm:$0x1]
  %v28 = vld [vmem:[%s5 + $0x3] sm:$0x1]
  %v29 = vld [vmem:[%s5 + $0x4] sm:$0x1]
  %v30 = vld [vmem:[%s5 + $0x5] sm:$0x1]
  %v31 = vld [vmem:[%s5 + $0x6] sm:$0x1]
  %v32 = vld [vmem:[%s5 + $0x7] sm:$0x1]
  %v33 = vld [vmem:[%s1] sm:$0xff]
  %v34 = vld [vmem:[%s1 + $0x8] sm:$0xff]
  %v35 = vld [vmem:[%s1 + $0x10] sm:$0xff]
  %v36 = vld [vmem:[%s1 + $0x18] sm:$0xff]
  %v37 = vld [vmem:[%s1 + $0x20] sm:$0xff]
  %v38 = vld [vmem:[%s1 + $0x28] sm:$0xff]
  %v39 = vld [vmem:[%s1 + $0x30] sm:$0xff]
  %v40 = vld [vmem:[%s1 + $0x38] sm:$0xff]
  %v41 = vld [vmem:[%s1 + $0x40] sm:$0xff]
  %v42 = vld [vmem:[%s1 + $0x48] sm:$0xff]
  %v43 = vld [vmem:[%s1 + $0x50] sm:$0xff]
  %v44 = vld [vmem:[%s1 + $0x58] sm:$0xff]
  %v45 = vld [vmem:[%s1 + $0x60] sm:$0xff]
  %v46 = vld [vmem:[%s1 + $0x68] sm:$0xff]
  %v47 = vlaneseq
  %v48 = vshrl.u32 %v47, 7
  %v49 = vsub.s32 0, %v48
  %v50 = vrot.slane %v25, %v49
  %vm51 = vcmask 916480
  %v53 = vsel %vm51, %v23, 0
  %v56 = vsel %vm51, %v24, 0
  %58 = vmatprep.subr.mxu0 0.0
  %59 = vmatpush1.msra.mxu0 %v33
  %60 = vmatprep.subr.mxu0 0.0
  %61 = vmatpush1.msra.mxu0 %v34
  %62 = vmatprep.subr.mxu0 0.0
  %63 = vmatpush1.msra.mxu0 %v35
  %64 = vmatprep.subr.mxu0 0.0
  %65 = vmatpush1.msra.mxu0 %v36
  %66 = vmatprep.subr.mxu0 0.0
  %67 = vmatpush1.msra.mxu0 %v37
  %68 = vmatprep.subr.mxu0 0.0
  %69 = vmatpush1.msra.mxu0 %v38
  %70 = vmatprep.subr.mxu0 0.0
  %71 = vmatpush1.msra.mxu0 %v39
  %72 = vmatprep.subr.mxu0 0.0
  %73 = vmatpush1.msra.mxu0 %v40
  %74 = vmatprep.subr.mxu0 0.0
  %75 = vmatpush1.msra.mxu0 %v41
  %76 = vmatprep.subr.mxu0 0.0
  %77 = vmatpush1.msra.mxu0 %v42
  %78 = vmatprep.subr.mxu0 0.0
  %79 = vmatpush1.msra.mxu0 %v43
  %80 = vmatprep.subr.mxu0 0.0
  %81 = vmatpush1.msra.mxu0 %v44
  %82 = vmatprep.subr.mxu0 0.0
  %83 = vmatpush1.msra.mxu0 %v45
  %84 = vmatprep.subr.mxu0 0.0
  %85 = vmatpush1.msra.mxu0 %v46
  %86 = vmatprep.subr.mxu0 0.0
  %87 = vmatpush1.msra.mxu0 0.0
  %88 = vmatprep.subr.mxu0 0.0
  %89 = vmatpush1.msra.mxu0 0.0
  %90 = vmatprep.subr.mxu0 0.0
  %91 = vmatpush1.msra.mxu0 0.0
  %92 = vmatprep.subr.mxu0 0.0
  %93 = vmatpush1.msra.mxu0 0.0
  %94 = vmatprep.subr.mxu0 0.0
  %95 = vmatpush1.msra.mxu0 0.0
  %96 = vmatprep.subr.mxu0 0.0
  %97 = vmatpush1.msra.mxu0 0.0
  %98 = vmatprep.subr.mxu0 0.0
  %99 = vmatpush1.msra.mxu0 0.0
  %100 = vmatprep.subr.mxu0 0.0
  %101 = vmatpush1.msra.mxu0 0.0
  %102 = vmatprep.subr.mxu0 0.0
  %103 = vmatpush1.msra.mxu0 0.0
  %104 = vmatprep.subr.mxu0 0.0
  %105 = vmatpush1.msra.mxu0 0.0
  %106 = vmatprep.subr.mxu0 0.0
  %107 = vmatpush1.msra.mxu0 0.0
  %108 = vmatprep.subr.mxu0 0.0
  %109 = vmatpush1.msra.mxu0 0.0
  %110 = vmatprep.subr.mxu0 0.0
  %111 = vmatpush1.msra.mxu0 0.0
  %112 = vmatprep.subr.mxu0 0.0
  %113 = vmatpush1.msra.mxu0 0.0
  %114 = vmatprep.subr.mxu0 0.0
  %115 = vmatpush1.msra.mxu0 0.0
  %116 = vmatprep.subr.mxu0 0.0
  %117 = vmatpush1.msra.mxu0 0.0
  %118 = vmatprep.subr.mxu0 0.0
  %119 = vmatpush1.msra.mxu0 0.0
  %120 = vmatprep.subr.mxu0 0.0
  %121 = vmatpush1.msra.mxu0 0.0
  %122 = vmatprep.mubr.f32.mxu0 0.0
  %123 = vmatmul.mubr.f32.gmra.mrb[0].mxu0 %v53
  %v124 = vpop.f32.mrb[0].mxu0
  %v125 = vadd.f32 %v50, %v124
  %v126 = vpop.f32.mrb[0].mxu0
  %127 = vmatprep.mubr.f32.mxu0 0.0
  %128 = vmatmul.mubr.f32.gmra.mrb[0].mxu0 %v56
  %v129 = vpop.f32.mrb[0].mxu0
  %v130 = vadd.f32 %v50, %v129
  %v131 = vpop.f32.mrb[0].mxu0
  %132 = vdwg.mxu0
  %v133 = vmax.f32 %v125, 0.0
  %v134 = vmax.f32 %v130, 0.0
  %v135 = vld [vmem:[%s2] sm:$0xff]
  %v136 = vld [vmem:[%s2 + $0x8] sm:$0xff]
  %v137 = vld [vmem:[%s2 + $0x10] sm:$0xff]
  %v138 = vld [vmem:[%s2 + $0x18] sm:$0xff]
  %v139 = vld [vmem:[%s2 + $0x20] sm:$0xff]
  %v140 = vld [vmem:[%s2 + $0x28] sm:$0xff]
  %v141 = vld [vmem:[%s2 + $0x30] sm:$0xff]
  %v142 = vld [vmem:[%s2 + $0x38] sm:$0xff]
  %v143 = vlaneseq
  %v144 = vshrl.u32 %v143, 7
  %v145 = vsub.s32 0, %v144
  %v146 = vrot.slane %v26, %v145
  %vm147 = vcmask 523264
  %v149 = vsel %vm147, %v133, 0
  %v152 = vsel %vm147, %v134, 0
  %154 = vmatprep.subr.mxu0 0.0
  %155 = vmatpush1.msra.mxu0 %v135
  %156 = vmatprep.subr.mxu0 0.0
  %157 = vmatpush1.msra.mxu0 %v136
  %158 = vmatprep.subr.mxu0 0.0
  %159 = vmatpush1.msra.mxu0 %v137
  %160 = vmatprep.subr.mxu0 0.0
  %161 = vmatpush1.msra.mxu0 %v138
  %162 = vmatprep.subr.mxu0 0.0
  %163 = vmatpush1.msra.mxu0 %v139
  %164 = vmatprep.subr.mxu0 0.0
  %165 = vmatpush1.msra.mxu0 %v140
  %166 = vmatprep.subr.mxu0 0.0
  %167 = vmatpush1.msra.mxu0 %v141
  %168 = vmatprep.subr.mxu0 0.0
  %169 = vmatpush1.msra.mxu0 %v142
  %170 = vmatprep.subr.mxu0 0.0
  %171 = vmatpush1.msra.mxu0 0.0
  %172 = vmatprep.subr.mxu0 0.0
  %173 = vmatpush1.msra.mxu0 0.0
  %174 = vmatprep.subr.mxu0 0.0
  %175 = vmatpush1.msra.mxu0 0.0
  %176 = vmatprep.subr.mxu0 0.0
  %177 = vmatpush1.msra.mxu0 0.0
  %178 = vmatprep.subr.mxu0 0.0
  %179 = vmatpush1.msra.mxu0 0.0
  %180 = vmatprep.subr.mxu0 0.0
  %181 = vmatpush1.msra.mxu0 0.0
  %182 = vmatprep.subr.mxu0 0.0
  %183 = vmatpush1.msra.mxu0 0.0
  %184 = vmatprep.subr.mxu0 0.0
  %185 = vmatpush1.msra.mxu0 0.0
  %186 = vmatprep.subr.mxu0 0.0
  %187 = vmatpush1.msra.mxu0 0.0
  %188 = vmatprep.subr.mxu0 0.0
  %189 = vmatpush1.msra.mxu0 0.0
  %190 = vmatprep.subr.mxu0 0.0
  %191 = vmatpush1.msra.mxu0 0.0
  %192 = vmatprep.subr.mxu0 0.0
  %193 = vmatpush1.msra.mxu0 0.0
  %194 = vmatprep.subr.mxu0 0.0
  %195 = vmatpush1.msra.mxu0 0.0
  %196 = vmatprep.subr.mxu0 0.0
  %197 = vmatpush1.msra.mxu0 0.0
  %198 = vmatprep.subr.mxu0 0.0
  %199 = vmatpush1.msra.mxu0 0.0
  %200 = vmatprep.subr.mxu0 0.0
  %201 = vmatpush1.msra.mxu0 0.0
  %202 = vmatprep.subr.mxu0 0.0
  %203 = vmatpush1.msra.mxu0 0.0
  %204 = vmatprep.subr.mxu0 0.0
  %205 = vmatpush1.msra.mxu0 0.0
  %206 = vmatprep.subr.mxu0 0.0
  %207 = vmatpush1.msra.mxu0 0.0
  %208 = vmatprep.subr.mxu0 0.0
  %209 = vmatpush1.msra.mxu0 0.0
  %210 = vmatprep.subr.mxu0 0.0
  %211 = vmatpush1.msra.mxu0 0.0
  %212 = vmatprep.subr.mxu0 0.0
  %213 = vmatpush1.msra.mxu0 0.0
  %214 = vmatprep.subr.mxu0 0.0
  %215 = vmatpush1.msra.mxu0 0.0
  %216 = vmatprep.subr.mxu0 0.0
  %217 = vmatpush1.msra.mxu0 0.0
  %218 = vmatprep.mubr.f32.mxu0 0.0
  %219 = vmatmul.mubr.f32.gmra.mrb[0].mxu0 %v149
  %v220 = vpop.f32.mrb[0].mxu0
  %v221 = vadd.f32 %v146, %v220
  %v222 = vpop.f32.mrb[0].mxu0
  %223 = vmatprep.mubr.f32.mxu0 0.0
  %224 = vmatmul.mubr.f32.gmra.mrb[0].mxu0 %v152
  %v225 = vpop.f32.mrb[0].mxu0
  %v226 = vadd.f32 %v146, %v225
  %v227 = vpop.f32.mrb[0].mxu0
  %228 = vdwg.mxu0
  %vm229 = vcmask 261120
  %v230 = vsel %vm229, %v221, 0.0
  %231 = vadd.xlane.f32.xlu0 %v230
  %v232 = vpop.xlane.xlu0 %231
  %v233 = vsel %vm229, %v226, 0.0
  %234 = vadd.xlane.f32.xlu0 %v233
  %v235 = vpop.xlane.xlu0 %234
  %v236 = vrcp.pop 32.0
  %v237 = vmul.f32 %v232, %v236
  %v238 = vmul.f32 %v235, %v236
  %v239 = vsub.f32 %v221, %v237
  %v240 = vsub.f32 %v226, %v238
  %v241 = vmul.f32 %v239, %v239
  %v242 = vmul.f32 %v240, %v240
  %v243 = vsel %vm229, %v241, 0.0
  %244 = vadd.xlane.f32.xlu0 %v243
  %v245 = vpop.xlane.xlu0 %244
  %v246 = vsel %vm229, %v242, 0.0
  %247 = vadd.xlane.f32.xlu0 %v246
  %v248 = vpop.xlane.xlu0 %247
  %v249 = vmul.f32 %v245, %v236
  %v250 = vmul.f32 %v248, %v236
  %v251 = vadd.f32 %v249, 1e-05
  %v252 = vadd.f32 %v250, 1e-05
  %v253 = vrsqrt.pop %v251
  %v254 = vrsqrt.pop %v252
  %v255 = vmul.f32 %v239, %v253
  %v256 = vmul.f32 %v240, %v254
  %v257 = vlaneseq
  %v258 = vshrl.u32 %v257, 7
  %v259 = vsub.s32 0, %v258
  %v260 = vrot.slane %v27, %v259
  %v261 = vmul.f32 %v255, %v260
  %v262 = vmul.f32 %v256, %v260
  %v263 = vlaneseq
  %v264 = vshrl.u32 %v263, 7
  %v265 = vsub.s32 0, %v264
  %v266 = vrot.slane %v28, %v265
  %v267 = vadd.f32 %v261, %v266
  %v268 = vadd.f32 %v262, %v266
  %v269 = vld [vmem:[%s3] sm:$0xff]
  %v270 = vld [vmem:[%s3 + $0x8] sm:$0xff]
  %v271 = vld [vmem:[%s3 + $0x10] sm:$0xff]
  %v272 = vld [vmem:[%s3 + $0x18] sm:$0xff]
  %v273 = vlaneseq
  %v274 = vshrl.u32 %v273, 7
  %v275 = vsub.s32 0, %v274
  %v276 = vrot.slane %v29, %v275
  %v278 = vsel %vm229, %v267, 0
  %v281 = vsel %vm229, %v268, 0
  %283 = vmatprep.subr.mxu0 0.0
  %284 = vmatpush1.msra.mxu0 %v269
  %285 = vmatprep.subr.mxu0 0.0
  %286 = vmatpush1.msra.mxu0 %v270
  %287 = vmatprep.subr.mxu0 0.0
  %288 = vmatpush1.msra.mxu0 %v271
  %289 = vmatprep.subr.mxu0 0.0
  %290 = vmatpush1.msra.mxu0 %v272
  %291 = vmatprep.subr.mxu0 0.0
  %292 = vmatpush1.msra.mxu0 0.0
  %293 = vmatprep.subr.mxu0 0.0
  %294 = vmatpush1.msra.mxu0 0.0
  %295 = vmatprep.subr.mxu0 0.0
  %296 = vmatpush1.msra.mxu0 0.0
  %297 = vmatprep.subr.mxu0 0.0
  %298 = vmatpush1.msra.mxu0 0.0
  %299 = vmatprep.subr.mxu0 0.0
  %300 = vmatpush1.msra.mxu0 0.0
  %301 = vmatprep.subr.mxu0 0.0
  %302 = vmatpush1.msra.mxu0 0.0
  %303 = vmatprep.subr.mxu0 0.0
  %304 = vmatpush1.msra.mxu0 0.0
  %305 = vmatprep.subr.mxu0 0.0
  %306 = vmatpush1.msra.mxu0 0.0
  %307 = vmatprep.subr.mxu0 0.0
  %308 = vmatpush1.msra.mxu0 0.0
  %309 = vmatprep.subr.mxu0 0.0
  %310 = vmatpush1.msra.mxu0 0.0
  %311 = vmatprep.subr.mxu0 0.0
  %312 = vmatpush1.msra.mxu0 0.0
  %313 = vmatprep.subr.mxu0 0.0
  %314 = vmatpush1.msra.mxu0 0.0
  %315 = vmatprep.subr.mxu0 0.0
  %316 = vmatpush1.msra.mxu0 0.0
  %317 = vmatprep.subr.mxu0 0.0
  %318 = vmatpush1.msra.mxu0 0.0
  %319 = vmatprep.subr.mxu0 0.0
  %320 = vmatpush1.msra.mxu0 0.0
  %321 = vmatprep.subr.mxu0 0.0
  %322 = vmatpush1.msra.mxu0 0.0
  %323 = vmatprep.subr.mxu0 0.0
  %324 = vmatpush1.msra.mxu0 0.0
  %325 = vmatprep.subr.mxu0 0.0
  %326 = vmatpush1.msra.mxu0 0.0
  %327 = vmatprep.subr.mxu0 0.0
  %328 = vmatpush1.msra.mxu0 0.0
  %329 = vmatprep.subr.mxu0 0.0
  %330 = vmatpush1.msra.mxu0 0.0
  %331 = vmatprep.subr.mxu0 0.0
  %332 = vmatpush1.msra.mxu0 0.0
  %333 = vmatprep.subr.mxu0 0.0
  %334 = vmatpush1.msra.mxu0 0.0
  %335 = vmatprep.subr.mxu0 0.0
  %336 = vmatpush1.msra.mxu0 0.0
  %337 = vmatprep.subr.mxu0 0.0
  %338 = vmatpush1.msra.mxu0 0.0
  %339 = vmatprep.subr.mxu0 0.0
  %340 = vmatpush1.msra.mxu0 0.0
  %341 = vmatprep.subr.mxu0 0.0
  %342 = vmatpush1.msra.mxu0 0.0
  %343 = vmatprep.subr.mxu0 0.0
  %344 = vmatpush1.msra.mxu0 0.0
  %345 = vmatprep.subr.mxu0 0.0
  %346 = vmatpush1.msra.mxu0 0.0
  %347 = vmatprep.mubr.f32.mxu0 0.0
  %348 = vmatmul.mubr.f32.gmra.mrb[0].mxu0 %v278
  %v349 = vpop.f32.mrb[0].mxu0
  %v350 = vadd.f32 %v276, %v349
  %v351 = vpop.f32.mrb[0].mxu0
  %352 = vmatprep.mubr.f32.mxu0 0.0
  %353 = vmatmul.mubr.f32.gmra.mrb[0].mxu0 %v281
  %v354 = vpop.f32.mrb[0].mxu0
  %v355 = vadd.f32 %v276, %v354
  %v356 = vpop.f32.mrb[0].mxu0
  %357 = vdwg.mxu0
  %v358 = vmul.f32 %v350, 0.5
  %v359 = vmul.f32 %v355, 0.5
  %v360 = vmul.f32 %v350, 0.70710677
  %v361 = vmul.f32 %v355, 0.70710677
  %vm362 = vcmp.ge.f32.partialorder %v360, 0.0
  %vm363 = vcmp.ge.f32.partialorder %v361, 0.0
  %v364 = vsel %vm362, 1.0, -1.0
  %v365 = vsel %vm363, 1.0, -1.0
  %v366 = vand.u32 2147483647, %v360
  %v367 = vand.u32 2147483647, %v361
  %v368 = vmul.f32 %v366, 0.3275911
  %v369 = vmul.f32 %v367, 0.3275911
  %v370 = vadd.f32 %v368, 1.0
  %v371 = vadd.f32 %v369, 1.0
  %v372 = vrcp.pop %v370
  %v373 = vmul.f32 1.0, %v372
  %v374 = vrcp.pop %v371
  %v375 = vmul.f32 1.0, %v374
  %v376 = vmul.f32 %v373, 1.0614054
  %v377 = vmul.f32 %v375, 1.0614054
  %v378 = vadd.f32 %v376, -1.4531521
  %v379 = vadd.f32 %v377, -1.4531521
  %v380 = vmul.f32 %v378, %v373
  %v381 = vmul.f32 %v379, %v375
  %v382 = vadd.f32 %v380, 1.4214138
  %v383 = vadd.f32 %v381, 1.4214138
  %v384 = vmul.f32 %v382, %v373
  %v385 = vmul.f32 %v383, %v375
  %v386 = vadd.f32 %v384, -0.28449672
  %v387 = vadd.f32 %v385, -0.28449672
  %v388 = vmul.f32 %v386, %v373
  %v389 = vmul.f32 %v387, %v375
  %v390 = vadd.f32 %v388, 0.2548296
  %v391 = vadd.f32 %v389, 0.2548296
  %v392 = vmul.f32 %v390, %v373
  %v393 = vmul.f32 %v391, %v375
  %v394 = vsub.f32 0.0, %v366
  %v395 = vsub.f32 0.0, %v367
  %v396 = vmul.f32 %v394, %v366
  %v397 = vmul.f32 %v395, %v367
  %v398 = vmul.f32 %v396, 1.442695
  %v399 = vpow.pop %v398
  %v400 = vmul.f32 %v397, 1.442695
  %v401 = vpow.pop %v400
  %v402 = vmul.f32 %v392, %v399
  %v403 = vmul.f32 %v393, %v401
  %v404 = vsub.f32 1.0, %v402
  %v405 = vsub.f32 1.0, %v403
  %v406 = vmul.f32 %v364, %v404
  %v407 = vmul.f32 %v365, %v405
  %v408 = vadd.f32 %v406, 1.0
  %v409 = vadd.f32 %v407, 1.0
  %v410 = vmul.f32 %v358, %v408
  %v411 = vmul.f32 %v359, %v409
  %v412 = vld [vmem:[%s4] sm:$0xff]
  %v413 = vlaneseq
  %v414 = vshrl.u32 %v413, 7
  %v415 = vsub.s32 0, %v414
  %v416 = vrot.slane %v30, %v415
  %vm417 = vcmask 64512
  %v419 = vsel %vm417, %v410, 0
  %v422 = vsel %vm417, %v411, 0
  %424 = vmatprep.subr.mxu0 0.0
  %425 = vmatpush1.msra.mxu0 %v412
  %426 = vmatprep.subr.mxu0 0.0
  %427 = vmatpush1.msra.mxu0 0.0
  %428 = vmatprep.subr.mxu0 0.0
  %429 = vmatpush1.msra.mxu0 0.0
  %430 = vmatprep.subr.mxu0 0.0
  %431 = vmatpush1.msra.mxu0 0.0
  %432 = vmatprep.subr.mxu0 0.0
  %433 = vmatpush1.msra.mxu0 0.0
  %434 = vmatprep.subr.mxu0 0.0
  %435 = vmatpush1.msra.mxu0 0.0
  %436 = vmatprep.subr.mxu0 0.0
  %437 = vmatpush1.msra.mxu0 0.0
  %438 = vmatprep.subr.mxu0 0.0
  %439 = vmatpush1.msra.mxu0 0.0
  %440 = vmatprep.subr.mxu0 0.0
  %441 = vmatpush1.msra.mxu0 0.0
  %442 = vmatprep.subr.mxu0 0.0
  %443 = vmatpush1.msra.mxu0 0.0
  %444 = vmatprep.subr.mxu0 0.0
  %445 = vmatpush1.msra.mxu0 0.0
  %446 = vmatprep.subr.mxu0 0.0
  %447 = vmatpush1.msra.mxu0 0.0
  %448 = vmatprep.subr.mxu0 0.0
  %449 = vmatpush1.msra.mxu0 0.0
  %450 = vmatprep.subr.mxu0 0.0
  %451 = vmatpush1.msra.mxu0 0.0
  %452 = vmatprep.subr.mxu0 0.0
  %453 = vmatpush1.msra.mxu0 0.0
  %454 = vmatprep.subr.mxu0 0.0
  %455 = vmatpush1.msra.mxu0 0.0
  %456 = vmatprep.subr.mxu0 0.0
  %457 = vmatpush1.msra.mxu0 0.0
  %458 = vmatprep.subr.mxu0 0.0
  %459 = vmatpush1.msra.mxu0 0.0
  %460 = vmatprep.subr.mxu0 0.0
  %461 = vmatpush1.msra.mxu0 0.0
  %462 = vmatprep.subr.mxu0 0.0
  %463 = vmatpush1.msra.mxu0 0.0
  %464 = vmatprep.subr.mxu0 0.0
  %465 = vmatpush1.msra.mxu0 0.0
  %466 = vmatprep.subr.mxu0 0.0
  %467 = vmatpush1.msra.mxu0 0.0
  %468 = vmatprep.subr.mxu0 0.0
  %469 = vmatpush1.msra.mxu0 0.0
  %470 = vmatprep.subr.mxu0 0.0
  %471 = vmatpush1.msra.mxu0 0.0
  %472 = vmatprep.subr.mxu0 0.0
  %473 = vmatpush1.msra.mxu0 0.0
  %474 = vmatprep.subr.mxu0 0.0
  %475 = vmatpush1.msra.mxu0 0.0
  %476 = vmatprep.subr.mxu0 0.0
  %477 = vmatpush1.msra.mxu0 0.0
  %478 = vmatprep.subr.mxu0 0.0
  %479 = vmatpush1.msra.mxu0 0.0
  %480 = vmatprep.subr.mxu0 0.0
  %481 = vmatpush1.msra.mxu0 0.0
  %482 = vmatprep.subr.mxu0 0.0
  %483 = vmatpush1.msra.mxu0 0.0
  %484 = vmatprep.subr.mxu0 0.0
  %485 = vmatpush1.msra.mxu0 0.0
  %486 = vmatprep.subr.mxu0 0.0
  %487 = vmatpush1.msra.mxu0 0.0
  %488 = vmatprep.mubr.f32.mxu0 0.0
  %489 = vmatmul.mubr.f32.gmra.mrb[0].mxu0 %v419
  %v490 = vpop.f32.mrb[0].mxu0
  %v491 = vadd.f32 %v416, %v490
  %v492 = vpop.f32.mrb[0].mxu0
  %493 = vmatprep.mubr.f32.mxu0 0.0
  %494 = vmatmul.mubr.f32.gmra.mrb[0].mxu0 %v422
  %v495 = vpop.f32.mrb[0].mxu0
  %v496 = vadd.f32 %v416, %v495
  %v497 = vpop.f32.mrb[0].mxu0
  %498 = vdwg.mxu0
  %v499 = vmul.f32 %v491, 0.5
  %v500 = vmul.f32 %v496, 0.5
  %v501 = vmul.f32 %v491, 0.70710677
  %v502 = vmul.f32 %v496, 0.70710677
  %vm503 = vcmp.ge.f32.partialorder %v501, 0.0
  %vm504 = vcmp.ge.f32.partialorder %v502, 0.0
  %v505 = vsel %vm503, 1.0, -1.0
  %v506 = vsel %vm504, 1.0, -1.0
  %v507 = vand.u32 2147483647, %v501
  %v508 = vand.u32 2147483647, %v502
  %v509 = vmul.f32 %v507, 0.3275911
  %v510 = vmul.f32 %v508, 0.3275911
  %v511 = vadd.f32 %v509, 1.0
  %v512 = vadd.f32 %v510, 1.0
  %v513 = vrcp.pop %v511
  %v514 = vmul.f32 1.0, %v513
  %v515 = vrcp.pop %v512
  %v516 = vmul.f32 1.0, %v515
  %v517 = vmul.f32 %v514, 1.0614054
  %v518 = vmul.f32 %v516, 1.0614054
  %v519 = vadd.f32 %v517, -1.4531521
  %v520 = vadd.f32 %v518, -1.4531521
  %v521 = vmul.f32 %v519, %v514
  %v522 = vmul.f32 %v520, %v516
  %v523 = vadd.f32 %v521, 1.4214138
  %v524 = vadd.f32 %v522, 1.4214138
  %v525 = vmul.f32 %v523, %v514
  %v526 = vmul.f32 %v524, %v516
  %v527 = vadd.f32 %v525, -0.28449672
  %v528 = vadd.f32 %v526, -0.28449672
  %v529 = vmul.f32 %v527, %v514
  %v530 = vmul.f32 %v528, %v516
  %v531 = vadd.f32 %v529, 0.2548296
  %v532 = vadd.f32 %v530, 0.2548296
  %v533 = vmul.f32 %v531, %v514
  %v534 = vmul.f32 %v532, %v516
  %v535 = vsub.f32 0.0, %v507
  %v536 = vsub.f32 0.0, %v508
  %v537 = vmul.f32 %v535, %v507
  %v538 = vmul.f32 %v536, %v508
  %v539 = vmul.f32 %v537, 1.442695
  %v540 = vpow.pop %v539
  %v541 = vmul.f32 %v538, 1.442695
  %v542 = vpow.pop %v541
  %v543 = vmul.f32 %v533, %v540
  %v544 = vmul.f32 %v534, %v542
  %v545 = vsub.f32 1.0, %v543
  %v546 = vsub.f32 1.0, %v544
  %v547 = vmul.f32 %v505, %v545
  %v548 = vmul.f32 %v506, %v546
  %v549 = vadd.f32 %v547, 1.0
  %v550 = vadd.f32 %v548, 1.0
  %v551 = vmul.f32 %v499, %v549
  %v552 = vmul.f32 %v500, %v550
  %v553 = vlaneseq
  %v554 = vshrl.u32 %v553, 7
  %v555 = vsub.s32 0, %v554
  %v556 = vrot.slane %v31, %v555
  %v557 = vmul.f32 %v551, %v556
  %v558 = vmul.f32 %v552, %v556
  %vm559 = vcmask 15360
  %v560 = vsel %vm559, %v557, 0.0
  %561 = vadd.xlane.f32.xlu0 %v560
  %v562 = vpop.xlane.xlu0 %561
  %v563 = vsel %vm559, %v558, 0.0
  %564 = vadd.xlane.f32.xlu0 %v563
  %v565 = vpop.xlane.xlu0 %564
  %v566 = vlaneseq
  %v567 = vshrl.u32 %v566, 7
  %v568 = vsub.s32 0, %v567
  %v569 = vrot.slane %v32, %v568
  %v570 = vadd.f32 %v562, %v569
  %v571 = vadd.f32 %v565, %v569
  %vm572 = vcmask 7168
  %573 = vst.msk [vmem:[%s6] sm:$0xff] %vm572, %v570
  %574 = vst.msk [vmem:[%s6 + $0x8] sm:$0xff] %vm572, %v571
  // Predicated region
  $region26: #{tpu_custom_call.1} parent=0 // pred_check
    _
  $region27: #{tpu_custom_call.1} parent=0 // pred_check_branch
    %576 = sbr.rel (0) target = $region29
  $region28: #{tpu_custom_call.1} parent=0 // pred_region
    _
  $region29: #{tpu_custom_call.1} parent=0 // pred_fallthru
    _
  // Predicated region
  $region30: #{tpu_custom_call.1} parent=0 // pred_check
    _
  $region31: #{tpu_custom_call.1} parent=0 // pred_check_branch
    %578 = sbr.rel (0) target = $region33
  $region32: #{tpu_custom_call.1} parent=0 // pred_region
    _
  $region33: #{tpu_custom_call.1} parent=0 // pred_fallthru
    _

</llo_original>
